<compile_context>
chip_gen: v7x
topology: tpu7x:2x2x1
jax: 0.10.0
libtpu: 0.0.40
codegen_flags: <defaults>
</compile_context>

<pallas_src>
import jax
import jax.numpy as jnp
from jax.experimental import pallas as pl
from jax.experimental.pallas import tpu as pltpu


def _round_up(x, m):
    return (x + m - 1) // m * m


def _make_mlp_kernel(num_layers):
    """Kernel over one row tile: full Linear/ReLU chain fused, weights resident in VMEM."""
    def kernel(*refs):
        x_ref = refs[0]
        wb_refs = refs[1:1 + 2 * num_layers]
        o_ref = refs[1 + 2 * num_layers]

        # bf16 operands on the MXU, f32 accumulation; bias add / ReLU in f32.
        h = x_ref[...].astype(jnp.bfloat16)
        for i in range(num_layers):
            w_ref = wb_refs[2 * i]
            b_ref = wb_refs[2 * i + 1]
            h = jnp.dot(h, w_ref[...], preferred_element_type=jnp.float32) + b_ref[...]
            if i < num_layers - 1:
                h = jnp.maximum(h, 0.0).astype(jnp.bfloat16)
        o_ref[...] = h.astype(o_ref.dtype)

    return kernel


def mlp_pallas(x, params, *, tm=8192, out_dtype=None):
    """x: (..., input_dim). params: list of (W_t, b) with W_t shape (in, out), b (1, out) or (out,).

    tm: row tile measured in *original* rows (sweep 4096-16384 for large workloads); it is
    automatically divided by the row-pack factor, capped by a VMEM budget, and shrunk so
    the grid keeps >= ~8 steps when M is large.
    """
    num_layers = len(params)
    in_dim = x.shape[-1]
    out_dim = params[-1][0].shape[-1]
    lead_shape = x.shape[:-1]
    out_dtype = x.dtype if out_dtype is None else out_dtype

    x2 = x.reshape(-1, in_dim)
    M = x2.shape[0]

    # ---- row packing factor (fold `pack` rows into the lane dim; all reshapes are free).
    pack = 1
    if in_dim < 128 and 128 % in_dim == 0:
        pack = min(128 // in_dim, 8)          # cap compute inflation of block-diag weights
    if pack > 1 and M % pack != 0:
        pack = 1                              # fallback: unpacked path

    Mp = M // pack
    din_p = pack * in_dim
    dout_p = pack * out_dim
    x2 = x2.reshape(Mp, din_p)                # free row-major reshape

    # ---- packed (block-diagonal) weights: bf16 MXU operands; biases stay f32.
    packed = []
    for (w, b) in params:
        b2 = b.reshape(1, -1)
        if pack > 1:
            wp = jnp.kron(jnp.eye(pack, dtype=w.dtype), w)   # block-diag (pack*in, pack*out)
            bp = jnp.tile(b2, (1, pack))
        else:
            wp, bp = w, b2
        packed.append((wp.astype(jnp.bfloat16), bp.astype(jnp.float32)))

    # ---- row-tile selection (packed rows).
    itemsize = jnp.dtype(x.dtype).itemsize
    gran = {4: 8, 2: 16, 1: 32}.get(itemsize, 8)      # sublane granularity for the x block
    tm_req = max(1, tm // pack)

    def _lanes(n):                                     # VMEM lane padding to 128
        return _round_up(n, 128)

    h_lanes = max([_lanes(wp.shape[1]) for (wp, _) in packed] + [_lanes(dout_p)])
    bytes_per_row = (2 * _lanes(din_p) * itemsize                       # x, double-buffered
                     + 2 * _lanes(dout_p) * jnp.dtype(out_dtype).itemsize  # out, double-buffered
                     + 3 * h_lanes * 4)                                 # f32 intermediates (rough)
    vmem_budget = 12 * 1024 * 1024                     # leave headroom under the 32 MiB limit
    tm_req = min(tm_req, max(gran, vmem_budget // bytes_per_row))

    cap = _round_up(pl.cdiv(Mp, 8), gran)              # keep >= ~8 grid steps when M is large
    tm_eff = max(gran, min(_round_up(tm_req, gran), cap))
    if tm_eff >= Mp:
        tm_eff = Mp                                    # single full-extent block (small inputs)

    grid = (pl.cdiv(Mp, tm_eff),)                      # ragged last block handled by Pallas

    # ---- specs.
    def full_spec(shape):
        zeros = (0,) * len(shape)
        return pl.BlockSpec(shape, lambda i: zeros)    # constant -> DMA'd once, VMEM resident

    in_specs = [pl.BlockSpec((tm_eff, din_p), lambda i: (i, 0))]
    flat_wb = []
    for (wp, bp) in packed:
        in_specs += [full_spec(wp.shape), full_spec(bp.shape)]
        flat_wb += [wp, bp]

    out = pl.pallas_call(
        _make_mlp_kernel(num_layers),
        out_shape=jax.ShapeDtypeStruct((Mp, dout_p), out_dtype),
        grid_spec=pltpu.PrefetchScalarGridSpec(
            num_scalar_prefetch=0,
            grid=grid,
            in_specs=in_specs,
            out_specs=pl.BlockSpec((tm_eff, dout_p), lambda i: (i, 0)),
        ),
        compiler_params=pltpu.CompilerParams(
            dimension_semantics=("parallel",),
            vmem_limit_bytes=32 * 1024 * 1024,
        ),
    )(x2, *flat_wb)

    return out.reshape(*lead_shape, out_dim)           # free metadata reshape


def init_mlp_params(key, input_dim, hidden_dim, output_dim, num_layers):
    """Deterministic init matching nn.Linear shapes (W: (out,in), b: (out,)).
    Returns weights pre-transposed to (in, out) for the kernel, all f32."""
    h = [hidden_dim] * (num_layers - 1)
    dims = list(zip([input_dim] + h, h + [output_dim]))
    params = []
    for (n, k_out) in dims:
        key, kw, kb = jax.random.split(key, 3)
        bound = 1.0 / jnp.sqrt(n)
        w = jax.random.uniform(kw, (k_out, n), jnp.float32, -bound, bound)  # PyTorch layout
        b = jax.random.uniform(kb, (1, k_out), jnp.float32, -bound, bound)
        params.append((w.T, b))   # pre-transpose for x @ W + b
    return params


def mlp_reference_f32(x, params):
    """Pure f32 reference (matches the PyTorch forward)."""
    h = x
    n = len(params)
    for i, (w, b) in enumerate(params):
        h = jnp.dot(h, w, preferred_element_type=jnp.float32) + b[0]
        if i < n - 1:
            h = jnp.maximum(h, 0.0)
    return h


def mlp_reference_quantized(x, params, compute_dtype=jnp.bfloat16):
    """Reference mimicking the kernel's dtype pattern: bf16 MXU operands, f32 accum."""
    h = x.astype(compute_dtype)
    n = len(params)
    for i, (w, b) in enumerate(params):
        h = jnp.dot(h, w.astype(compute_dtype),
                    preferred_element_type=jnp.float32) + b[0]
        if i < n - 1:
            h = jnp.maximum(h, 0.0).astype(compute_dtype)
    return h


def _check(y, x, params):
    y_q = mlp_reference_quantized(x, params)
    assert jnp.allclose(y, y_q, atol=2e-3, rtol=2e-3), "mismatch vs quantized ref"
    # Loose check vs the pure-f32 PyTorch-equivalent forward (bf16 operand rounding only).
    y_f = mlp_reference_f32(x, params)
    assert jnp.allclose(y, y_f, atol=5e-2, rtol=5e-2), "mismatch vs f32 ref"


if __name__ == "__main__":
    key = jax.random.PRNGKey(0)
    input_dim, hidden_dim, output_dim, num_layers = 32, 32, 4, 3
    kp, kx1, kx2, kx3 = jax.random.split(key, 4)
    params = init_mlp_params(kp, input_dim, hidden_dim, output_dim, num_layers)

    # 1) small shape matching the module's usage (batch=2, seq=8): packed path, single block.
    x1 = jax.random.normal(kx1, (2, 8, input_dim), jnp.float32)
    y1 = jax.block_until_ready(mlp_pallas(x1, params))
    assert y1.shape == (2, 8, output_dim)
    _check(y1, x1, params)

    # 2) multi-step grid with a ragged last block (M=300 rows, small tile forces 5 steps).
    x2 = jax.random.normal(kx2, (3, 100, input_dim), jnp.float32)
    y2 = jax.block_until_ready(mlp_pallas(x2, params, tm=64))
    assert y2.shape == (3, 100, output_dim)
    _check(y2, x2, params)

    # 3) unpacked fallback path (M=10 is not a multiple of the row-pack factor), ragged grid.
    x3 = jax.random.normal(kx3, (1, 10, input_dim), jnp.float32)
    y3 = jax.block_until_ready(mlp_pallas(x3, params))
    assert y3.shape == (1, 10, output_dim)
    _check(y3, x3, params)

    print("KERNEL_OK")
</pallas_src>

<mosaic_0001>
module attributes {stable_mosaic.version = 11 : i64} {
  func.func @kernel(%arg0: i32, %arg1: memref<4x128xf32, #tpu.memory_space<vmem>>, %arg2: memref<128x128xbf16, #tpu.memory_space<vmem>>, %arg3: memref<1x128xf32, #tpu.memory_space<vmem>>, %arg4: memref<128x128xbf16, #tpu.memory_space<vmem>>, %arg5: memref<1x128xf32, #tpu.memory_space<vmem>>, %arg6: memref<128x16xbf16, #tpu.memory_space<vmem>>, %arg7: memref<1x16xf32, #tpu.memory_space<vmem>>, %arg8: memref<4x16xf32, #tpu.memory_space<vmem>>) attributes {dimension_semantics = [#tpu.dimension_semantics<parallel>], iteration_bounds = array<i64: 1>, scalar_prefetch = 0 : i64, scratch_operands = 0 : i64, tpu.core_type = #tpu.core_type<tc>, window_params = [{transform_indices = @transform_0, window_bounds = array<i64: 4, 128>}, {pipeline_mode = #tpu.pipeline_mode<synchronous>, transform_indices = @transform_1, window_bounds = array<i64: 128, 128>}, {pipeline_mode = #tpu.pipeline_mode<synchronous>, transform_indices = @transform_2, window_bounds = array<i64: 1, 128>}, {pipeline_mode = #tpu.pipeline_mode<synchronous>, transform_indices = @transform_3, window_bounds = array<i64: 128, 128>}, {pipeline_mode = #tpu.pipeline_mode<synchronous>, transform_indices = @transform_4, window_bounds = array<i64: 1, 128>}, {pipeline_mode = #tpu.pipeline_mode<synchronous>, transform_indices = @transform_5, window_bounds = array<i64: 128, 16>}, {pipeline_mode = #tpu.pipeline_mode<synchronous>, transform_indices = @transform_6, window_bounds = array<i64: 1, 16>}, {transform_indices = @transform_7, window_bounds = array<i64: 4, 16>}]} {
    %c0 = arith.constant 0 : index
    %c0_0 = arith.constant 0 : index
    %0 = vector.load %arg1[%c0, %c0_0] : memref<4x128xf32, #tpu.memory_space<vmem>>, vector<4x128xf32>
    %1 = arith.truncf %0 : vector<4x128xf32> to vector<4x128xbf16>
    %c0_1 = arith.constant 0 : index
    %c0_2 = arith.constant 0 : index
    %2 = vector.load %arg2[%c0_1, %c0_2] : memref<128x128xbf16, #tpu.memory_space<vmem>>, vector<128x128xbf16>
    %cst = arith.constant dense<0.000000e+00> : vector<4x128xf32>
    %3 = tpu.matmul %1, %2, %cst {dimension_numbers = #tpu.dot_dimension_numbers<[1], [0], [0], [1], [0, 0, 1, 1], [], []>} : vector<4x128xbf16>, vector<128x128xbf16>, vector<4x128xf32> -> vector<4x128xf32>
    %c0_3 = arith.constant 0 : index
    %c0_4 = arith.constant 0 : index
    %4 = vector.load %arg3[%c0_3, %c0_4] : memref<1x128xf32, #tpu.memory_space<vmem>>, vector<1x128xf32>
    %5 = vector.broadcast %4 : vector<1x128xf32> to vector<4x128xf32>
    %6 = arith.addf %3, %5 : vector<4x128xf32>
    %cst_5 = arith.constant 0.000000e+00 : f32
    %7 = vector.broadcast %cst_5 : f32 to vector<4x128xf32>
    %8 = arith.maximumf %6, %7 : vector<4x128xf32>
    %9 = arith.truncf %8 : vector<4x128xf32> to vector<4x128xbf16>
    %c0_6 = arith.constant 0 : index
    %c0_7 = arith.constant 0 : index
    %10 = vector.load %arg4[%c0_6, %c0_7] : memref<128x128xbf16, #tpu.memory_space<vmem>>, vector<128x128xbf16>
    %cst_8 = arith.constant dense<0.000000e+00> : vector<4x128xf32>
    %11 = tpu.matmul %9, %10, %cst_8 {dimension_numbers = #tpu.dot_dimension_numbers<[1], [0], [0], [1], [0, 0, 1, 1], [], []>} : vector<4x128xbf16>, vector<128x128xbf16>, vector<4x128xf32> -> vector<4x128xf32>
    %c0_9 = arith.constant 0 : index
    %c0_10 = arith.constant 0 : index
    %12 = vector.load %arg5[%c0_9, %c0_10] : memref<1x128xf32, #tpu.memory_space<vmem>>, vector<1x128xf32>
    %13 = vector.broadcast %12 : vector<1x128xf32> to vector<4x128xf32>
    %14 = arith.addf %11, %13 : vector<4x128xf32>
    %cst_11 = arith.constant 0.000000e+00 : f32
    %15 = vector.broadcast %cst_11 : f32 to vector<4x128xf32>
    %16 = arith.maximumf %14, %15 : vector<4x128xf32>
    %17 = arith.truncf %16 : vector<4x128xf32> to vector<4x128xbf16>
    %c0_12 = arith.constant 0 : index
    %c0_13 = arith.constant 0 : index
    %18 = vector.load %arg6[%c0_12, %c0_13] : memref<128x16xbf16, #tpu.memory_space<vmem>>, vector<128x16xbf16>
    %cst_14 = arith.constant dense<0.000000e+00> : vector<4x16xf32>
    %19 = tpu.matmul %17, %18, %cst_14 {dimension_numbers = #tpu.dot_dimension_numbers<[1], [0], [0], [1], [0, 0, 1, 1], [], []>} : vector<4x128xbf16>, vector<128x16xbf16>, vector<4x16xf32> -> vector<4x16xf32>
    %c0_15 = arith.constant 0 : index
    %c0_16 = arith.constant 0 : index
    %20 = vector.load %arg7[%c0_15, %c0_16] : memref<1x16xf32, #tpu.memory_space<vmem>>, vector<1x16xf32>
    %21 = vector.broadcast %20 : vector<1x16xf32> to vector<4x16xf32>
    %22 = arith.addf %19, %21 : vector<4x16xf32>
    %c0_17 = arith.constant 0 : index
    %c0_18 = arith.constant 0 : index
    %23 = vector.load %arg8[%c0_17, %c0_18] : memref<4x16xf32, #tpu.memory_space<vmem>>, vector<4x16xf32>
    tpu.vector_store %arg8[%c0_17, %c0_18], %22 {strides = array<i32>} : memref<4x16xf32, #tpu.memory_space<vmem>>, vector<4x16xf32>,
    return
  }
  func.func @transform_0(%arg0: i32) -> (i32, i32) {
    %c0_i32 = arith.constant 0 : i32
    %c0_i32_0 = arith.constant 0 : i32
    return %arg0, %c0_i32 : i32, i32
  }
  func.func @transform_1(%arg0: i32) -> (i32, i32) {
    %c0_i32 = arith.constant 0 : i32
    %c0_i32_0 = arith.constant 0 : i32
    %c0_i32_1 = arith.constant 0 : i32
    return %c0_i32, %c0_i32_0 : i32, i32
  }
  func.func @transform_2(%arg0: i32) -> (i32, i32) {
    %c0_i32 = arith.constant 0 : i32
    %c0_i32_0 = arith.constant 0 : i32
    %c0_i32_1 = arith.constant 0 : i32
    return %c0_i32, %c0_i32_0 : i32, i32
  }
  func.func @transform_3(%arg0: i32) -> (i32, i32) {
    %c0_i32 = arith.constant 0 : i32
    %c0_i32_0 = arith.constant 0 : i32
    %c0_i32_1 = arith.constant 0 : i32
    return %c0_i32, %c0_i32_0 : i32, i32
  }
  func.func @transform_4(%arg0: i32) -> (i32, i32) {
    %c0_i32 = arith.constant 0 : i32
    %c0_i32_0 = arith.constant 0 : i32
    %c0_i32_1 = arith.constant 0 : i32
    return %c0_i32, %c0_i32_0 : i32, i32
  }
  func.func @transform_5(%arg0: i32) -> (i32, i32) {
    %c0_i32 = arith.constant 0 : i32
    %c0_i32_0 = arith.constant 0 : i32
    %c0_i32_1 = arith.constant 0 : i32
    return %c0_i32, %c0_i32_0 : i32, i32
  }
  func.func @transform_6(%arg0: i32) -> (i32, i32) {
    %c0_i32 = arith.constant 0 : i32
    %c0_i32_0 = arith.constant 0 : i32
    %c0_i32_1 = arith.constant 0 : i32
    return %c0_i32, %c0_i32_0 : i32, i32
  }
  func.func @transform_7(%arg0: i32) -> (i32, i32) {
    %c0_i32 = arith.constant 0 : i32
    %c0_i32_0 = arith.constant 0 : i32
    return %arg0, %c0_i32 : i32, i32
  }
}

</mosaic_0001>

<llo_original>
// kernel: tpu_custom_call.1
$region0: #{tpu_custom_call.1}
  #allocation0 [shape = 'u32[]', space=smem, size = 0x4, offset = 0x4, fixed_abs, tag = 'smem constant byte address 0x4 - core index']
  #allocation1 [shape = 'u32[144,128]{1,0:T(1,128)}', space=vmem, size = 0x12000, scoped, tag = 'internal scratch']
  %s0 = inlined_call_operand.vmem [shape: f32[4,128], index: 0, kind: input, shape index: {}]
  %s1 = inlined_call_operand.vmem [shape: bf16[128,128], index: 1, kind: input, shape index: {}]
  %s2 = inlined_call_operand.vmem [shape: f32[1,128], index: 2, kind: input, shape index: {}]
  %s3 = inlined_call_operand.hbm [shape: bf16[128,128], index: 3, kind: input, shape index: {}]
  %s4 = inlined_call_operand.vmem [shape: f32[1,128], index: 4, kind: input, shape index: {}]
  %s5 = inlined_call_operand.vmem [shape: bf16[128,16], index: 5, kind: input, shape index: {}]
  %s6 = inlined_call_operand.vmem [shape: f32[1,16], index: 6, kind: input, shape index: {}]
  %s7 = inlined_call_operand.hbm [shape: f32[4,16], index: 7, kind: output, shape index: {}]
  %s8 = sld [smem:[#allocation0]]
  $region42: #{tpu_custom_call.1} parent=0
    _
  %s10 = ssub.s32 1, %s8
  %s11 = scalar_select 0, %s10, %s8
  $region1: #{tpu_custom_call.1} parent=0
    #allocation2 [shape = 'u8[32768]{0}', space=vmem, size = 0x8000, scoped, tag = 'input window, operand 3, single buffered']
    #allocation3 [shape = 's32[1]{0}', space=sflag, size = 0x4, scoped, tag = 'scoped memory for tpu_custom_call.1']
    #allocation4 [shape = 's32[1]{0}', space=sflag, size = 0x4, scoped, tag = 'scoped memory for tpu_custom_call.1']
    #allocation5 [shape = 'u8[2048]{0}', space=vmem, size = 0x800, scoped, tag = 'output window, operand 0, single buffered']
    %12 = vsyncpa [#allocation3], 0
    %13 = vsyncpa [#allocation4], 0
    // Predicated region
    $region2: #{tpu_custom_call.1} parent=1 // pred_check
      _
    $region3: #{tpu_custom_call.1} parent=1 // pred_check_branch
      %15 = sbr.rel (0) target = $region5
    $region4: #{tpu_custom_call.1} parent=1 // pred_region
      _
    $region5: #{tpu_custom_call.1} parent=1 // pred_fallthru
      _
    // Predicated region
    $region6: #{tpu_custom_call.1} parent=1 // pred_check
      _
    $region7: #{tpu_custom_call.1} parent=1 // pred_check_branch
      %17 = sbr.rel (0) target = $region9
    $region8: #{tpu_custom_call.1} parent=1 // pred_region
      _
    $region9: #{tpu_custom_call.1} parent=1 // pred_fallthru
      _
    // Predicated region
    $region10: #{tpu_custom_call.1} parent=1 // pred_check
      _
    $region11: #{tpu_custom_call.1} parent=1 // pred_check_branch
      %19 = sbr.rel (0) target = $region13
    $region12: #{tpu_custom_call.1} parent=1 // pred_region
      _
    $region13: #{tpu_custom_call.1} parent=1 // pred_fallthru
      _
    // Predicated region
    $region14: #{tpu_custom_call.1} parent=1 // pred_check
      _
    $region15: #{tpu_custom_call.1} parent=1 // pred_check_branch
      %21 = sbr.rel (0) target = $region17
    $region16: #{tpu_custom_call.1} parent=1 // pred_region
      %s23 = ssub.s32 1024, 1024
      %24 = vsyncadd [#allocation3], %s23
      %s25 = sshll.u32 [#allocation2], 4
      %s26 = int_to_ptr.vmem [resolvable:$true] %s25
      %31 = dma.hbm_to_vmem [thread:$0]  %s3, 1024, %s26, [#allocation3], 64, 64, 4
    $region17: #{tpu_custom_call.1} parent=1 // pred_fallthru
      _
    // Predicated region
    $region18: #{tpu_custom_call.1} parent=1 // pred_check
      _
    $region19: #{tpu_custom_call.1} parent=1 // pred_check_branch
      %33 = sbr.rel (0) target = $region21
    $region20: #{tpu_custom_call.1} parent=1 // pred_region
      _
    $region21: #{tpu_custom_call.1} parent=1 // pred_fallthru
      _
    // Predicated region
    $region22: #{tpu_custom_call.1} parent=1 // pred_check
      _
    $region23: #{tpu_custom_call.1} parent=1 // pred_check_branch
      %35 = sbr.rel (0) target = $region25
    $region24: #{tpu_custom_call.1} parent=1 // pred_region
      _
    $region25: #{tpu_custom_call.1} parent=1 // pred_fallthru
      _
    // Predicated region
    $region26: #{tpu_custom_call.1} parent=1 // pred_check
      _
    $region27: #{tpu_custom_call.1} parent=1 // pred_check_branch
      %37 = sbr.rel (0) target = $region29
    $region28: #{tpu_custom_call.1} parent=1 // pred_region
      _
    $region29: #{tpu_custom_call.1} parent=1 // pred_fallthru
      _
    // Predicated region
    $region30: #{tpu_custom_call.1} parent=1 // pred_check
      _
    $region31: #{tpu_custom_call.1} parent=1 // pred_check_branch
      %39 = sbr.rel (0) target = $region33
    $region32: #{tpu_custom_call.1} parent=1 // pred_region
      %40 = dma.done [#allocation3], 1024
    $region33: #{tpu_custom_call.1} parent=1 // pred_fallthru
      _
    %v42 = vld [vmem:[%s0] sm:$0xf]
    %v43 = vpack.c.bf16 %v42, %v42
    %v44 = vld [vmem:[%s1] sm:$0xf]
    %v45 = vld [vmem:[%s1 + $0x4] sm:$0xf]
    %v46 = vld [vmem:[%s1 + $0x8] sm:$0xf]
    %v47 = vld [vmem:[%s1 + $0xc] sm:$0xf]
    %v48 = vld [vmem:[%s1 + $0x10] sm:$0xf]
    %v49 = vld [vmem:[%s1 + $0x14] sm:$0xf]
    %v50 = vld [vmem:[%s1 + $0x18] sm:$0xf]
    %v51 = vld [vmem:[%s1 + $0x1c] sm:$0xf]
    %v52 = vld [vmem:[%s1 + $0x20] sm:$0xf]
    %v53 = vld [vmem:[%s1 + $0x24] sm:$0xf]
    %v54 = vld [vmem:[%s1 + $0x28] sm:$0xf]
    %v55 = vld [vmem:[%s1 + $0x2c] sm:$0xf]
    %v56 = vld [vmem:[%s1 + $0x30] sm:$0xf]
    %v57 = vld [vmem:[%s1 + $0x34] sm:$0xf]
    %v58 = vld [vmem:[%s1 + $0x38] sm:$0xf]
    %v59 = vld [vmem:[%s1 + $0x3c] sm:$0xf]
    %v60 = vld [vmem:[%s2] sm:$0x1]
    %v62 = vlaneseq
    %v63 = vshrl.u32 %v62, 7
    %v64 = vsub.s32 0, %v63
    %v65 = vrot.slane %v60, %v64
    %v83 = vunpack.c.l.b16 %v44
    %v84 = vunpack.c.l.b16 %v45
    %v85 = vunpack.c.l.b16 %v46
    %v86 = vunpack.c.l.b16 %v47
    %v87 = vunpack.c.l.b16 %v48
    %v88 = vunpack.c.l.b16 %v49
    %v89 = vunpack.c.l.b16 %v50
    %v90 = vunpack.c.l.b16 %v51
    %v91 = vunpack.c.l.b16 %v52
    %v92 = vunpack.c.l.b16 %v53
    %v93 = vunpack.c.l.b16 %v54
    %v94 = vunpack.c.l.b16 %v55
    %v95 = vunpack.c.l.b16 %v56
    %v96 = vunpack.c.l.b16 %v57
    %v97 = vunpack.c.l.b16 %v58
    %v98 = vunpack.c.l.b16 %v59
    %v99 = vpack.c.b16 %v84, %v83
    %v100 = vpack.c.b16 %v86, %v85
    %v101 = vpack.c.b16 %v88, %v87
    %v102 = vpack.c.b16 %v90, %v89
    %v103 = vpack.c.b16 %v92, %v91
    %v104 = vpack.c.b16 %v94, %v93
    %v105 = vpack.c.b16 %v96, %v95
    %v106 = vpack.c.b16 %v98, %v97
    %115 = vmatprep.subr.bf16.mxu0 0
    %116 = vmatpush1.bf16.msra.mxu0 %v99
    %117 = vmatprep.subr.bf16.mxu0 0
    %118 = vmatpush1.bf16.msra.mxu0 %v100
    %119 = vmatprep.subr.bf16.mxu0 0
    %120 = vmatpush1.bf16.msra.mxu0 %v101
    %121 = vmatprep.subr.bf16.mxu0 0
    %122 = vmatpush1.bf16.msra.mxu0 %v102
    %123 = vmatprep.subr.bf16.mxu0 0
    %124 = vmatpush1.bf16.msra.mxu0 %v103
    %125 = vmatprep.subr.bf16.mxu0 0
    %126 = vmatpush1.bf16.msra.mxu0 %v104
    %127 = vmatprep.subr.bf16.mxu0 0
    %128 = vmatpush1.bf16.msra.mxu0 %v105
    %129 = vmatprep.subr.bf16.mxu0 0
    %130 = vmatpush1.bf16.msra.mxu0 %v106
    %131 = vmatprep.subr.bf16.mxu0 0
    %132 = vmatpush1.bf16.msra.mxu0 0
    %133 = vmatprep.subr.bf16.mxu0 0
    %134 = vmatpush1.bf16.msra.mxu0 0
    %135 = vmatprep.subr.bf16.mxu0 0
    %136 = vmatpush1.bf16.msra.mxu0 0
    %137 = vmatprep.subr.bf16.mxu0 0
    %138 = vmatpush1.bf16.msra.mxu0 0
    %139 = vmatprep.subr.bf16.mxu0 0
    %140 = vmatpush1.bf16.msra.mxu0 0
    %141 = vmatprep.subr.bf16.mxu0 0
    %142 = vmatpush1.bf16.msra.mxu0 0
    %143 = vmatprep.subr.bf16.mxu0 0
    %144 = vmatpush1.bf16.msra.mxu0 0
    %145 = vmatprep.subr.bf16.mxu0 0
    %146 = vmatpush1.bf16.msra.mxu0 0
    %147 = vmatprep.mubr.bf16.mxu0 0
    %148 = vmatmul.mubr.bf16.gmra.mrb[0].mxu0 %v43
    %v149 = vpop.f32.mrb[0].mxu0
    %v150 = vadd.f32 %v65, %v149
    %v151 = vpop.f32.mrb[0].mxu0
    %v152 = vpop.f32.mrb[0].mxu0
    %v153 = vpop.f32.mrb[0].mxu0
    %154 = vdwg.mxu0
    %v155 = vmax.f32 %v150, 0.0
    %v156 = vpack.c.bf16 %v155, %v155
    %v157 = vld [vmem:[#allocation2] sm:$0xf]
    %v158 = vld [vmem:[#allocation2 + $0x4] sm:$0xf]
    %v159 = vld [vmem:[#allocation2 + $0x8] sm:$0xf]
    %v160 = vld [vmem:[#allocation2 + $0xc] sm:$0xf]
    %v161 = vld [vmem:[#allocation2 + $0x10] sm:$0xf]
    %v162 = vld [vmem:[#allocation2 + $0x14] sm:$0xf]
    %v163 = vld [vmem:[#allocation2 + $0x18] sm:$0xf]
    %v164 = vld [vmem:[#allocation2 + $0x1c] sm:$0xf]
    %v165 = vld [vmem:[#allocation2 + $0x20] sm:$0xf]
    %v166 = vld [vmem:[#allocation2 + $0x24] sm:$0xf]
    %v167 = vld [vmem:[#allocation2 + $0x28] sm:$0xf]
    %v168 = vld [vmem:[#allocation2 + $0x2c] sm:$0xf]
    %v169 = vld [vmem:[#allocation2 + $0x30] sm:$0xf]
    %v170 = vld [vmem:[#allocation2 + $0x34] sm:$0xf]
    %v171 = vld [vmem:[#allocation2 + $0x38] sm:$0xf]
    %v172 = vld [vmem:[#allocation2 + $0x3c] sm:$0xf]
    %v173 = vld [vmem:[%s4] sm:$0x1]
    %v175 = vlaneseq
    %v176 = vshrl.u32 %v175, 7
    %v177 = vsub.s32 0, %v176
    %v178 = vrot.slane %v173, %v177
    %v196 = vunpack.c.l.b16 %v157
    %v197 = vunpack.c.l.b16 %v158
    %v198 = vunpack.c.l.b16 %v159
    %v199 = vunpack.c.l.b16 %v160
    %v200 = vunpack.c.l.b16 %v161
    %v201 = vunpack.c.l.b16 %v162
    %v202 = vunpack.c.l.b16 %v163
    %v203 = vunpack.c.l.b16 %v164
    %v204 = vunpack.c.l.b16 %v165
    %v205 = vunpack.c.l.b16 %v166
    %v206 = vunpack.c.l.b16 %v167
    %v207 = vunpack.c.l.b16 %v168
    %v208 = vunpack.c.l.b16 %v169
    %v209 = vunpack.c.l.b16 %v170
    %v210 = vunpack.c.l.b16 %v171
    %v211 = vunpack.c.l.b16 %v172
    %v212 = vpack.c.b16 %v197, %v196
    %v213 = vpack.c.b16 %v199, %v198
    %v214 = vpack.c.b16 %v201, %v200
    %v215 = vpack.c.b16 %v203, %v202
    %v216 = vpack.c.b16 %v205, %v204
    %v217 = vpack.c.b16 %v207, %v206
    %v218 = vpack.c.b16 %v209, %v208
    %v219 = vpack.c.b16 %v211, %v210
    %228 = vmatprep.subr.bf16.mxu0 0
    %229 = vmatpush1.bf16.msra.mxu0 %v212
    %230 = vmatprep.subr.bf16.mxu0 0
    %231 = vmatpush1.bf16.msra.mxu0 %v213
    %232 = vmatprep.subr.bf16.mxu0 0
    %233 = vmatpush1.bf16.msra.mxu0 %v214
    %234 = vmatprep.subr.bf16.mxu0 0
    %235 = vmatpush1.bf16.msra.mxu0 %v215
    %236 = vmatprep.subr.bf16.mxu0 0
    %237 = vmatpush1.bf16.msra.mxu0 %v216
    %238 = vmatprep.subr.bf16.mxu0 0
    %239 = vmatpush1.bf16.msra.mxu0 %v217
    %240 = vmatprep.subr.bf16.mxu0 0
    %241 = vmatpush1.bf16.msra.mxu0 %v218
    %242 = vmatprep.subr.bf16.mxu0 0
    %243 = vmatpush1.bf16.msra.mxu0 %v219
    %244 = vmatprep.subr.bf16.mxu0 0
    %245 = vmatpush1.bf16.msra.mxu0 0
    %246 = vmatprep.subr.bf16.mxu0 0
    %247 = vmatpush1.bf16.msra.mxu0 0
    %248 = vmatprep.subr.bf16.mxu0 0
    %249 = vmatpush1.bf16.msra.mxu0 0
    %250 = vmatprep.subr.bf16.mxu0 0
    %251 = vmatpush1.bf16.msra.mxu0 0
    %252 = vmatprep.subr.bf16.mxu0 0
    %253 = vmatpush1.bf16.msra.mxu0 0
    %254 = vmatprep.subr.bf16.mxu0 0
    %255 = vmatpush1.bf16.msra.mxu0 0
    %256 = vmatprep.subr.bf16.mxu0 0
    %257 = vmatpush1.bf16.msra.mxu0 0
    %258 = vmatprep.subr.bf16.mxu0 0
    %259 = vmatpush1.bf16.msra.mxu0 0
    %260 = vmatprep.mubr.bf16.mxu0 0
    %261 = vmatmul.mubr.bf16.gmra.mrb[0].mxu0 %v156
    %v262 = vpop.f32.mrb[0].mxu0
    %v263 = vadd.f32 %v178, %v262
    %v264 = vpop.f32.mrb[0].mxu0
    %v265 = vpop.f32.mrb[0].mxu0
    %v266 = vpop.f32.mrb[0].mxu0
    %267 = vdwg.mxu0
    %v268 = vmax.f32 %v263, 0.0
    %v269 = vpack.c.bf16 %v268, %v268
    %v270 = vld [vmem:[%s5] sm:$0xf]
    %v271 = vld [vmem:[%s5 + $0x4] sm:$0xf]
    %v272 = vld [vmem:[%s5 + $0x8] sm:$0xf]
    %v273 = vld [vmem:[%s5 + $0xc] sm:$0xf]
    %v274 = vld [vmem:[%s5 + $0x10] sm:$0xf]
    %v275 = vld [vmem:[%s5 + $0x14] sm:$0xf]
    %v276 = vld [vmem:[%s5 + $0x18] sm:$0xf]
    %v277 = vld [vmem:[%s5 + $0x1c] sm:$0xf]
    %v278 = vld [vmem:[%s5 + $0x20] sm:$0xf]
    %v279 = vld [vmem:[%s5 + $0x24] sm:$0xf]
    %v280 = vld [vmem:[%s5 + $0x28] sm:$0xf]
    %v281 = vld [vmem:[%s5 + $0x2c] sm:$0xf]
    %v282 = vld [vmem:[%s5 + $0x30] sm:$0xf]
    %v283 = vld [vmem:[%s5 + $0x34] sm:$0xf]
    %v284 = vld [vmem:[%s5 + $0x38] sm:$0xf]
    %v285 = vld [vmem:[%s5 + $0x3c] sm:$0xf]
    %v286 = vld [vmem:[%s6] sm:$0x1]
    %v288 = vlaneseq
    %v289 = vshrl.u32 %v288, 7
    %v290 = vsub.s32 0, %v289
    %v291 = vrot.slane %v286, %v290
    %v309 = vunpack.c.l.b16 %v270
    %v310 = vunpack.c.l.b16 %v271
    %v311 = vunpack.c.l.b16 %v272
    %v312 = vunpack.c.l.b16 %v273
    %v313 = vunpack.c.l.b16 %v274
    %v314 = vunpack.c.l.b16 %v275
    %v315 = vunpack.c.l.b16 %v276
    %v316 = vunpack.c.l.b16 %v277
    %v317 = vunpack.c.l.b16 %v278
    %v318 = vunpack.c.l.b16 %v279
    %v319 = vunpack.c.l.b16 %v280
    %v320 = vunpack.c.l.b16 %v281
    %v321 = vunpack.c.l.b16 %v282
    %v322 = vunpack.c.l.b16 %v283
    %v323 = vunpack.c.l.b16 %v284
    %v324 = vunpack.c.l.b16 %v285
    %v325 = vpack.c.b16 %v310, %v309
    %v326 = vpack.c.b16 %v312, %v311
    %v327 = vpack.c.b16 %v314, %v313
    %v328 = vpack.c.b16 %v316, %v315
    %v329 = vpack.c.b16 %v318, %v317
    %v330 = vpack.c.b16 %v320, %v319
    %v331 = vpack.c.b16 %v322, %v321
    %v332 = vpack.c.b16 %v324, %v323
    %341 = vmatprep.subr.bf16.mxu0 0
    %342 = vmatpush1.bf16.msra.mxu0 %v325
    %343 = vmatprep.subr.bf16.mxu0 0
    %344 = vmatpush1.bf16.msra.mxu0 %v326
    %345 = vmatprep.subr.bf16.mxu0 0
    %346 = vmatpush1.bf16.msra.mxu0 %v327
    %347 = vmatprep.subr.bf16.mxu0 0
    %348 = vmatpush1.bf16.msra.mxu0 %v328
    %349 = vmatprep.subr.bf16.mxu0 0
    %350 = vmatpush1.bf16.msra.mxu0 %v329
    %351 = vmatprep.subr.bf16.mxu0 0
    %352 = vmatpush1.bf16.msra.mxu0 %v330
    %353 = vmatprep.subr.bf16.mxu0 0
    %354 = vmatpush1.bf16.msra.mxu0 %v331
    %355 = vmatprep.subr.bf16.mxu0 0
    %356 = vmatpush1.bf16.msra.mxu0 %v332
    %357 = vmatprep.subr.bf16.mxu0 0
    %358 = vmatpush1.bf16.msra.mxu0 0
    %359 = vmatprep.subr.bf16.mxu0 0
    %360 = vmatpush1.bf16.msra.mxu0 0
    %361 = vmatprep.subr.bf16.mxu0 0
    %362 = vmatpush1.bf16.msra.mxu0 0
    %363 = vmatprep.subr.bf16.mxu0 0
    %364 = vmatpush1.bf16.msra.mxu0 0
    %365 = vmatprep.subr.bf16.mxu0 0
    %366 = vmatpush1.bf16.msra.mxu0 0
    %367 = vmatprep.subr.bf16.mxu0 0
    %368 = vmatpush1.bf16.msra.mxu0 0
    %369 = vmatprep.subr.bf16.mxu0 0
    %370 = vmatpush1.bf16.msra.mxu0 0
    %371 = vmatprep.subr.bf16.mxu0 0
    %372 = vmatpush1.bf16.msra.mxu0 0
    %373 = vmatprep.mubr.bf16.mxu0 0
    %374 = vmatmul.mubr.bf16.gmra.mrb[0].mxu0 %v269
    %v375 = vpop.f32.mrb[0].mxu0
    %v376 = vadd.f32 %v291, %v375
    %v377 = vpop.f32.mrb[0].mxu0
    %v378 = vpop.f32.mrb[0].mxu0
    %v379 = vpop.f32.mrb[0].mxu0
    %380 = vdwg.mxu0
    %vm381 = vcmask 125952
    %382 = vst.msk [vmem:[#allocation5] sm:$0xf] %vm381, %v376
    // Predicated region
    $region34: #{tpu_custom_call.1} parent=1 // pred_check
      _
    $region35: #{tpu_custom_call.1} parent=1 // pred_check_branch
      %384 = sbr.rel (0) target = $region37
    $region36: #{tpu_custom_call.1} parent=1 // pred_region
      %s386 = ssub.s32 64, 64
      %387 = vsyncadd [#allocation4], %s386
      %s389 = sshll.u32 [#allocation5], 4
      %s390 = int_to_ptr.vmem [resolvable:$true] %s389
      %392 = dma.vmem_to_hbm [thread:$0]  %s390, 64, %s7, [#allocation4]
    $region37: #{tpu_custom_call.1} parent=1 // pred_fallthru
      _
    // Predicated region
    $region38: #{tpu_custom_call.1} parent=1 // pred_check
      _
    $region39: #{tpu_custom_call.1} parent=1 // pred_check_branch
      %394 = sbr.rel (0) target = $region41
    $region40: #{tpu_custom_call.1} parent=1 // pred_region
      %395 = dma.done [#allocation4], 64
    $region41: #{tpu_custom_call.1} parent=1 // pred_fallthru
      _
    %396 = vsyncpa [#allocation3], 1
    %397 = vsyncpa [#allocation4], 1

</llo_original>
